<compile_context>
chip_gen: v7x
topology: tpu7x:2x2x1
jax: 0.10.0
libtpu: 0.0.40
codegen_flags: <defaults>
</compile_context>

<pallas_src>
import functools

import jax
import jax.numpy as jnp
from jax.experimental import pallas as pl
from jax.experimental.pallas import tpu as pltpu


def _pow_static(x, p):
    """x**p for a static exponent.

    Small integer exponents become VPU multiplies (exponentiation by squaring)
    instead of the exp(p*log(x)) EUP chain that jnp.power with a float exponent
    lowers to. Falls back to jnp.power for non-integer exponents.
    """
    pf = float(p)
    if pf == int(pf) and 0 <= int(pf) <= 16:
        n = int(pf)
        if n == 0:
            return jnp.ones_like(x)
        result = None
        base = x
        while n:
            if n & 1:
                result = base if result is None else result * base
            n >>= 1
            if n:
                base = base * base
        return result
    return jnp.power(x, jnp.float32(pf))


def _gfl_elementwise(pred, tgt, alpha, gamma):
    """Elementwise gaussian focal loss (f32 math), negation folded."""
    eps = jnp.float32(1e-12)
    one = jnp.float32(1.0)
    p = pred.astype(jnp.float32)
    t = tgt.astype(jnp.float32)
    one_m_p = one - p
    one_m_t = one - t
    pos = jnp.log(p + eps) * _pow_static(one_m_p, alpha) * t
    neg = jnp.log(one_m_p + eps) * _pow_static(p, alpha) * _pow_static(one_m_t, gamma)
    return -(pos + neg)


def _gfl_partial_kernel(pred_ref, tgt_ref, out_ref, *, rows_total, needs_mask,
                        alpha, gamma):
    """Per-grid-block partial sum of the gaussian focal loss."""
    loss = _gfl_elementwise(pred_ref[...], tgt_ref[...], alpha, gamma)

    # Unmasked cross-lane reduce: every block pays only the loss math + one sum.
    out_ref[0, 0] = jnp.sum(loss)

    if needs_mask:
        # Only the last block can extend past the array; its overhang rows hold
        # garbage (possibly NaN after the log), so recompute a row-masked sum
        # there and overwrite.  All other blocks skip this entirely.
        i = pl.program_id(0)
        brows = pred_ref.shape[0]

        @pl.when(i == pl.num_programs(0) - 1)
        def _():
            row_ids = jax.lax.broadcasted_iota(jnp.int32, (brows, 1), 0)
            valid = (i * brows + row_ids) < rows_total
            out_ref[0, 0] = jnp.sum(jnp.where(valid, loss, jnp.float32(0.0)))


def _round_up(x, m):
    return (x + m - 1) // m * m


def _grid_semantics(num_blocks):
    """CORE_PARALLEL on v7x-family (2 TC/chip) when there is work to split."""
    if num_blocks >= 2:
        try:
            kind = jax.devices()[0].device_kind.lower()
        except Exception:  # pragma: no cover - defensive
            kind = ""
        if "v7" in kind:
            return (pltpu.CORE_PARALLEL,)
    return ("parallel",)


def gaussian_focal_loss_mean(pred, target, *, alpha=2.0, gamma=4.0,
                             loss_weight=1.0, tile_rows=None, lanes=128):
    """Equivalent of GaussianFocalLoss()(pred, target) with default args
    (reduction='mean', weight=None, avg_factor=None, protect=False).

    pred/target: same-shape float tensors (e.g. NCHW). Returns a scalar f32.
    """
    assert pred.shape == target.shape
    n_elems = pred.size

    pred_flat = pred.reshape(-1)    # reshape of contiguous array: no HBM copy
    tgt_flat = target.reshape(-1)

    rows = n_elems // lanes
    n_main = rows * lanes

    itemsize = jnp.dtype(pred.dtype).itemsize
    # Min sublane granularity depends on dtype packing (f32:8, bf16:16, 8-bit:32).
    sub = {4: 8, 2: 16, 1: 32}.get(itemsize, 8)

    total = jnp.float32(0.0)

    if rows > 0:
        if n_main == n_elems:
            pred2d = pred_flat.reshape(rows, lanes)
            tgt2d = tgt_flat.reshape(rows, lanes)
        else:
            # Lane-aligned prefix only (tail handled below in XLA); no jnp.pad
            # round trip of the full tensors.
            pred2d = pred_flat[:n_main].reshape(rows, lanes)
            tgt2d = tgt_flat[:n_main].reshape(rows, lanes)

        if tile_rows is None:
            # Target ~2 MiB of input bytes per input per grid step.
            eff_tile_rows = max(sub, (2 * 1024 * 1024) // (lanes * itemsize))
        else:
            eff_tile_rows = tile_rows

        if rows <= eff_tile_rows:
            block_rows = rows           # full-dim block: always a legal shape
        else:
            block_rows = _round_up(min(eff_tile_rows, rows), sub)

        num_blocks = pl.cdiv(rows, block_rows)
        needs_mask = (rows % block_rows) != 0

        # VMEM budget derived from the block: 2 inputs x double buffer + f32
        # temporaries of the elementwise chain + margin; capped below the v7x
        # 64 MiB per-TC ceiling.
        block_in_bytes = block_rows * lanes * itemsize
        block_f32_bytes = block_rows * lanes * 4
        vmem_limit = 4 * block_in_bytes + 10 * block_f32_bytes + (4 << 20)
        vmem_limit = max(min(vmem_limit, 56 << 20), 16 << 20)

        kernel = functools.partial(_gfl_partial_kernel, rows_total=rows,
                                   needs_mask=needs_mask, alpha=alpha,
                                   gamma=gamma)

        partials = pl.pallas_call(
            kernel,
            out_shape=jax.ShapeDtypeStruct((num_blocks, 1), jnp.float32),
            grid_spec=pltpu.PrefetchScalarGridSpec(
                num_scalar_prefetch=0,
                grid=(num_blocks,),
                in_specs=[
                    pl.BlockSpec((block_rows, lanes), lambda i: (i, 0)),
                    pl.BlockSpec((block_rows, lanes), lambda i: (i, 0)),
                ],
                out_specs=pl.BlockSpec((1, 1), lambda i: (i, 0),
                                       memory_space=pltpu.SMEM),
            ),
            compiler_params=pltpu.CompilerParams(
                dimension_semantics=_grid_semantics(num_blocks),
                vmem_limit_bytes=int(vmem_limit),
            ),
        )(pred2d, tgt2d)

        total = total + jnp.sum(partials)

    if n_main < n_elems:
        # Ragged tail (< 128 elements): trivial in plain XLA, no padding copy.
        tail = _gfl_elementwise(pred_flat[n_main:], tgt_flat[n_main:],
                                alpha, gamma)
        total = total + jnp.sum(tail)

    # mean over the ORIGINAL element count, then loss_weight scale (scalar glue).
    return jnp.float32(loss_weight) * total / jnp.float32(n_elems)


# TODO(synk): protect=True path (33x33 ones conv2d dilation of the target) not
# implemented in-kernel; module default is protect=False.


if __name__ == "__main__":
    key = jax.random.PRNGKey(0)
    k1, k2, k3, k4 = jax.random.split(key, 4)

    def ref_loss(pred, target, alpha=2.0, gamma=4.0, loss_weight=1.0):
        eps = 1e-12
        p = pred.astype(jnp.float32)
        t = target.astype(jnp.float32)
        pos = -jnp.log(p + eps) * (1.0 - p) ** alpha * t
        neg = -jnp.log(1.0 - p + eps) * p ** alpha * (1.0 - t) ** gamma
        return loss_weight * jnp.mean(pos + neg)

    # Case 1: NCHW f32, lane-aligned size (2*4*16*16 = 2048), single block.
    B, C, H, W = 2, 4, 16, 16
    pred = jax.nn.sigmoid(jax.random.normal(k1, (B, C, H, W), jnp.float32))
    target = jax.random.uniform(k2, (B, C, H, W), jnp.float32)
    out = jax.block_until_ready(gaussian_focal_loss_mean(pred, target))
    ref = ref_loss(pred, target)
    assert jnp.allclose(out, ref, rtol=1e-5, atol=1e-6), (out, ref)

    # Case 2: ragged size (2610 elems, not a multiple of 128) + multi-block grid
    # with a partial final block (small tile_rows forces grid > 1) -> exercises
    # both the last-block row mask and the XLA tail path.
    pred2 = jax.nn.sigmoid(jax.random.normal(k3, (1, 3, 30, 29), jnp.float32))
    target2 = jax.random.uniform(k4, (1, 3, 30, 29), jnp.float32)
    out2 = jax.block_until_ready(
        gaussian_focal_loss_mean(pred2, target2, tile_rows=8))
    ref2 = ref_loss(pred2, target2)
    assert jnp.allclose(out2, ref2, rtol=1e-5, atol=1e-6), (out2, ref2)

    # Case 3: bf16 inputs stay bf16 in HBM (half the DMA bytes); f32 in-kernel.
    pred3 = pred.astype(jnp.bfloat16)
    target3 = target.astype(jnp.bfloat16)
    out3 = jax.block_until_ready(gaussian_focal_loss_mean(pred3, target3))
    ref3 = ref_loss(pred3, target3)
    assert jnp.allclose(out3, ref3, rtol=1e-5, atol=1e-6), (out3, ref3)

    print("KERNEL_OK")
</pallas_src>

<mosaic_0001>
module attributes {stable_mosaic.version = 11 : i64} {
  func.func @_gfl_partial_kernel(%arg0: i32, %arg1: memref<16x128xf32, #tpu.memory_space<vmem>>, %arg2: memref<16x128xf32, #tpu.memory_space<vmem>>, %arg3: memref<1x1xf32, #tpu.memory_space<smem>>) attributes {dimension_semantics = [#tpu.dimension_semantics<parallel>], iteration_bounds = array<i64: 1>, scalar_prefetch = 0 : i64, scratch_operands = 0 : i64, tpu.core_type = #tpu.core_type<tc>, window_params = [{transform_indices = @transform_0, window_bounds = array<i64: 16, 128>}, {transform_indices = @transform_1, window_bounds = array<i64: 16, 128>}, {transform_indices = @transform_2, window_bounds = array<i64: 1, 1>}]} {
    %c0 = arith.constant 0 : index
    %c0_0 = arith.constant 0 : index
    %0 = vector.load %arg1[%c0, %c0_0] : memref<16x128xf32, #tpu.memory_space<vmem>>, vector<16x128xf32>
    %c0_1 = arith.constant 0 : index
    %c0_2 = arith.constant 0 : index
    %1 = vector.load %arg2[%c0_1, %c0_2] : memref<16x128xf32, #tpu.memory_space<vmem>>, vector<16x128xf32>
    %cst = arith.constant 1.000000e+00 : f32
    %2 = vector.broadcast %cst : f32 to vector<16x128xf32>
    %3 = arith.subf %2, %0 : vector<16x128xf32>
    %cst_3 = arith.constant 1.000000e+00 : f32
    %4 = vector.broadcast %cst_3 : f32 to vector<16x128xf32>
    %5 = arith.subf %4, %1 : vector<16x128xf32>
    %cst_4 = arith.constant 9.99999996E-13 : f32
    %6 = vector.broadcast %cst_4 : f32 to vector<16x128xf32>
    %7 = arith.addf %0, %6 : vector<16x128xf32>
    %8 = math.log %7 : vector<16x128xf32>
    %9 = arith.mulf %3, %3 : vector<16x128xf32>
    %10 = arith.mulf %8, %9 : vector<16x128xf32>
    %11 = arith.mulf %10, %1 : vector<16x128xf32>
    %cst_5 = arith.constant 9.99999996E-13 : f32
    %12 = vector.broadcast %cst_5 : f32 to vector<16x128xf32>
    %13 = arith.addf %3, %12 : vector<16x128xf32>
    %14 = math.log %13 : vector<16x128xf32>
    %15 = arith.mulf %0, %0 : vector<16x128xf32>
    %16 = arith.mulf %14, %15 : vector<16x128xf32>
    %17 = arith.mulf %5, %5 : vector<16x128xf32>
    %18 = arith.mulf %17, %17 : vector<16x128xf32>
    %19 = arith.mulf %16, %18 : vector<16x128xf32>
    %20 = arith.addf %11, %19 : vector<16x128xf32>
    %cst_6 = arith.constant 0.000000e+00 : f32
    %21 = vector.broadcast %cst_6 : f32 to vector<16x128xf32>
    %22 = arith.subf %21, %20 : vector<16x128xf32>
    %23 = vector.shape_cast %22 : vector<16x128xf32> to vector<1x16x128xf32>
    %cst_7 = arith.constant dense<0.000000e+00> : vector<1xf32>
    %24 = vector.multi_reduction <add>, %23, %cst_7 [1, 2] : vector<1x16x128xf32> to vector<1xf32>
    %25 = vector.shape_cast %24 : vector<1xf32> to vector<1x1x1xf32>
    %26 = vector.extract %25[0, 0, 0] : f32 from vector<1x1x1xf32>
    %c0_8 = arith.constant 0 : index
    %c0_9 = arith.constant 0 : index
    %27 = memref.load %arg3[%c0_8, %c0_9] : memref<1x1xf32, #tpu.memory_space<smem>>
    memref.store %26, %arg3[%c0_8, %c0_9] : memref<1x1xf32, #tpu.memory_space<smem>>
    return
  }
  func.func @transform_0(%arg0: i32) -> (i32, i32) {
    %c0_i32 = arith.constant 0 : i32
    %c0_i32_0 = arith.constant 0 : i32
    return %arg0, %c0_i32 : i32, i32
  }
  func.func @transform_1(%arg0: i32) -> (i32, i32) {
    %c0_i32 = arith.constant 0 : i32
    %c0_i32_0 = arith.constant 0 : i32
    return %arg0, %c0_i32 : i32, i32
  }
  func.func @transform_2(%arg0: i32) -> (i32, i32) {
    %c0_i32 = arith.constant 0 : i32
    %c0_i32_0 = arith.constant 0 : i32
    return %arg0, %c0_i32 : i32, i32
  }
}

</mosaic_0001>

<llo_original>
// kernel: tpu_custom_call.1
$region0: #{tpu_custom_call.1}
  #allocation0 [shape = 'u32[]', space=smem, size = 0x4, offset = 0x4, fixed_abs, tag = 'smem constant byte address 0x4 - core index']
  #allocation1 [shape = 'u32[144,128]{1,0:T(1,128)}', space=vmem, size = 0x12000, scoped, tag = 'internal scratch']
  %s0 = inlined_call_operand.hbm [shape: f32[16,128], index: 0, kind: input, shape index: {}]
  %s1 = inlined_call_operand.hbm [shape: f32[16,128], index: 1, kind: input, shape index: {}]
  %s2 = inlined_call_operand.hbm [shape: f32[1,1], index: 2, kind: output, shape index: {}]
  %s3 = sld [smem:[#allocation0]]
  $region26: #{tpu_custom_call.1} parent=0
    _
  %s5 = ssub.s32 1, %s3
  %s6 = scalar_select 0, %s5, %s3
  $region1: #{tpu_custom_call.1} parent=0
    #allocation2 [shape = 'u8[8192]{0}', space=vmem, size = 0x2000, scoped, tag = 'input window, operand 0, single buffered']
    #allocation3 [shape = 's32[1]{0}', space=sflag, size = 0x4, scoped, tag = 'scoped memory for tpu_custom_call.1']
    #allocation4 [shape = 's32[1]{0}', space=sflag, size = 0x4, scoped, tag = 'scoped memory for tpu_custom_call.1']
    #allocation5 [shape = 'u8[8192]{0}', space=vmem, size = 0x2000, scoped, tag = 'input window, operand 1, single buffered']
    #allocation6 [shape = 's32[1]{0}', space=sflag, size = 0x4, scoped, tag = 'scoped memory for tpu_custom_call.1']
    #allocation7 [shape = 'u8[512]{0}', space=smem, size = 0x200, scoped, tag = 'output window, operand 0, single buffered']
    %7 = vsyncpa [#allocation3], 0
    %8 = vsyncpa [#allocation6], 0
    %9 = vsyncpa [#allocation4], 0
    // Predicated region
    $region2: #{tpu_custom_call.1} parent=1 // pred_check
      _
    $region3: #{tpu_custom_call.1} parent=1 // pred_check_branch
      %11 = sbr.rel (0) target = $region5
    $region4: #{tpu_custom_call.1} parent=1 // pred_region
      %s13 = ssub.s32 256, 256
      %14 = vsyncadd [#allocation3], %s13
      %s15 = sshll.u32 [#allocation2], 4
      %s16 = int_to_ptr.vmem [resolvable:$true] %s15
      %21 = dma.hbm_to_vmem [thread:$0]  %s0, 256, %s16, [#allocation3], 128, 128, 8
    $region5: #{tpu_custom_call.1} parent=1 // pred_fallthru
      _
    // Predicated region
    $region6: #{tpu_custom_call.1} parent=1 // pred_check
      _
    $region7: #{tpu_custom_call.1} parent=1 // pred_check_branch
      %23 = sbr.rel (0) target = $region9
    $region8: #{tpu_custom_call.1} parent=1 // pred_region
      %s25 = ssub.s32 256, 256
      %26 = vsyncadd [#allocation6], %s25
      %s27 = sshll.u32 [#allocation5], 4
      %s28 = int_to_ptr.vmem [resolvable:$true] %s27
      %33 = dma.hbm_to_vmem [thread:$0]  %s1, 256, %s28, [#allocation6], 128, 128, 8
    $region9: #{tpu_custom_call.1} parent=1 // pred_fallthru
      _
    // Predicated region
    $region10: #{tpu_custom_call.1} parent=1 // pred_check
      _
    $region11: #{tpu_custom_call.1} parent=1 // pred_check_branch
      %35 = sbr.rel (0) target = $region13
    $region12: #{tpu_custom_call.1} parent=1 // pred_region
      %36 = dma.done [#allocation3], 256
    $region13: #{tpu_custom_call.1} parent=1 // pred_fallthru
      _
    // Predicated region
    $region14: #{tpu_custom_call.1} parent=1 // pred_check
      _
    $region15: #{tpu_custom_call.1} parent=1 // pred_check_branch
      %38 = sbr.rel (0) target = $region17
    $region16: #{tpu_custom_call.1} parent=1 // pred_region
      %39 = dma.done [#allocation6], 256
    $region17: #{tpu_custom_call.1} parent=1 // pred_fallthru
      _
    %v40 = vld [vmem:[#allocation2] sm:$0xff]
    %v41 = vld [vmem:[#allocation2 + $0x8] sm:$0xff]
    %v42 = vld [vmem:[#allocation5] sm:$0xff]
    %v43 = vld [vmem:[#allocation5 + $0x8] sm:$0xff]
    %v44 = vsub.f32 1.0, %v40
    %v45 = vsub.f32 1.0, %v41
    %v46 = vsub.f32 1.0, %v42
    %v47 = vsub.f32 1.0, %v43
    %v48 = vadd.f32 %v40, 1e-12
    %v49 = vadd.f32 %v41, 1e-12
    %v50 = vlog2.pop %v48
    %v51 = vmul.f32 %v50, 0.6931472
    %v52 = vlog2.pop %v49
    %v53 = vmul.f32 %v52, 0.6931472
    %v54 = vmul.f32 %v44, %v44
    %v55 = vmul.f32 %v45, %v45
    %v56 = vmul.f32 %v51, %v54
    %v57 = vmul.f32 %v53, %v55
    %v58 = vmul.f32 %v56, %v42
    %v59 = vmul.f32 %v57, %v43
    %v60 = vadd.f32 %v44, 1e-12
    %v61 = vadd.f32 %v45, 1e-12
    %v62 = vlog2.pop %v60
    %v63 = vmul.f32 %v62, 0.6931472
    %v64 = vlog2.pop %v61
    %v65 = vmul.f32 %v64, 0.6931472
    %v66 = vmul.f32 %v40, %v40
    %v67 = vmul.f32 %v41, %v41
    %v68 = vmul.f32 %v63, %v66
    %v69 = vmul.f32 %v65, %v67
    %v70 = vmul.f32 %v46, %v46
    %v71 = vmul.f32 %v47, %v47
    %v72 = vmul.f32 %v70, %v70
    %v73 = vmul.f32 %v71, %v71
    %v74 = vmul.f32 %v68, %v72
    %v75 = vmul.f32 %v69, %v73
    %v76 = vadd.f32 %v58, %v74
    %v77 = vadd.f32 %v59, %v75
    %v78 = vsub.f32 0.0, %v76
    %v79 = vsub.f32 0.0, %v77
    %v80 = vadd.f32 %v78, %v79
    %81 = vadd.xlane.f32.xlu0 %v80
    %v82 = vpop.xlane.xlu0 %81
    %v83 = vrot.slane %v82, 4
    %v84 = vadd.f32 %v82, %v83
    %v85 = vrot.slane %v84, 2
    %v86 = vadd.f32 %v84, %v85
    %v87 = vrot.slane %v86, 1
    %v88 = vadd.f32 %v86, %v87
    %s89 = vtos %v88
    %s90 = scalar_lea.smem [#allocation7], 0
    %91 = sst [smem:[%s90]] %s89
    // Predicated region
    $region18: #{tpu_custom_call.1} parent=1 // pred_check
      _
    $region19: #{tpu_custom_call.1} parent=1 // pred_check_branch
      %93 = sbr.rel (0) target = $region21
    $region20: #{tpu_custom_call.1} parent=1 // pred_region
      %s95 = ssub.s32 16, 16
      %96 = vsyncadd [#allocation4], %s95
      %99 = dma.smem_to_hbm [#allocation7], 16, %s2, [#allocation4]
    $region21: #{tpu_custom_call.1} parent=1 // pred_fallthru
      _
    // Predicated region
    $region22: #{tpu_custom_call.1} parent=1 // pred_check
      _
    $region23: #{tpu_custom_call.1} parent=1 // pred_check_branch
      %101 = sbr.rel (0) target = $region25
    $region24: #{tpu_custom_call.1} parent=1 // pred_region
      %102 = dma.done [#allocation4], 16
    $region25: #{tpu_custom_call.1} parent=1 // pred_fallthru
      _
    %103 = sfence
    %104 = vsyncpa [#allocation3], 1
    %105 = vsyncpa [#allocation6], 1
    %106 = vsyncpa [#allocation4], 1

</llo_original>
